<compile_context>
chip_gen: v7x
topology: tpu7x:2x2x1
jax: 0.10.0
libtpu: 0.0.40
codegen_flags: <defaults>
</compile_context>

<pallas_src>
from functools import partial

import jax
import jax.numpy as jnp
from jax.experimental import pallas as pl
from jax.experimental.pallas import tpu as pltpu


# ------------------------------------- kernel ------------------------------------------

def _ncc_cc_kernel(y_ref, x_ref, kbox_ref, cc_ref, *, win_size):
    # y_ref / x_ref : (1, C, HW)  one batch element, channels on sublanes, pixels on lanes.
    # kbox_ref      : (HW, HW)    0/1 box-window matrix (zero-padded 7x7 window as a matmul).
    # cc_ref        : (1, C, HW)  per-pixel signed local cc map (lane-dense output block).
    y = y_ref[0].astype(jnp.float32)            # (C, HW)
    x = x_ref[0].astype(jnp.float32)
    kb = kbox_ref[...]                          # hoist the weight load once

    def box(m):  # zero-padded win x win box sum == one lane-dense K=HW MXU matmul
        return jnp.dot(m, kb, preferred_element_type=jnp.float32)

    y_sum = box(y)
    x_sum = box(x)
    y2_sum = box(y * y)
    x2_sum = box(x * x)
    xy_sum = box(x * y)

    inv_ws = 1.0 / win_size
    u_y = y_sum * inv_ws
    u_x = x_sum * inv_ws
    cross = xy_sum - u_x * y_sum - u_y * x_sum + u_y * u_x * win_size
    y_var = y2_sum - 2.0 * u_y * y_sum + u_y * u_y * win_size
    x_var = x2_sum - 2.0 * u_x * x_sum + u_x * u_x * win_size
    cc = cross * cross / (y_var * x_var + 1e-5) * (cross / (jnp.abs(cross) + 1e-5))
    cc_ref[0] = cc.astype(cc_ref.dtype)


# ------------------------------------ wrappers ------------------------------------------

def _box_matrix(H, W, win):
    """K[(i*W+j), (i'*W+j')] = 1 iff |i-i'|<=win0//2 and |j-j'|<=win1//2.

    Right-multiplying a (C, H*W) image slab by K gives exactly the zero-padded,
    stride-1 `win`-window box sum of the reference F.conv2d(ones kernel, padding=win//2).
    """
    rh, rw = win[0] // 2, win[1] // 2
    ih = jnp.arange(H)
    iw = jnp.arange(W)
    ah = (jnp.abs(ih[:, None] - ih[None, :]) <= rh).astype(jnp.float32)   # (H, H)
    aw = (jnp.abs(iw[:, None] - iw[None, :]) <= rw).astype(jnp.float32)   # (W, W)
    return (ah[:, None, :, None] * aw[None, :, None, :]).reshape(H * W, H * W)


def ncc_loss(y_true, y_pred, win=(7, 7)):
    """Pallas TPU implementation of NCC.forward (NCHW inputs, first 3 channels used)."""
    assert y_true.ndim == 4 and y_pred.shape == y_true.shape
    B, _, H, W = y_true.shape
    C = 3                                   # forward() uses channels 0..2 (R, G, B) only
    HW = H * W
    y = y_true[:, :C].reshape(B, C, HW).astype(jnp.float32)
    x = y_pred[:, :C].reshape(B, C, HW).astype(jnp.float32)
    kbox = _box_matrix(H, W, win)
    win_size = float(win[0] * win[1])

    cc = pl.pallas_call(
        partial(_ncc_cc_kernel, win_size=win_size),
        out_shape=jax.ShapeDtypeStruct((B, C, HW), jnp.float32),
        grid=(B,),
        in_specs=[
            pl.BlockSpec((1, C, HW), lambda b: (b, 0, 0)),
            pl.BlockSpec((1, C, HW), lambda b: (b, 0, 0)),
            pl.BlockSpec((HW, HW), lambda b: (0, 0)),     # broadcast, fetched once
        ],
        out_specs=pl.BlockSpec((1, C, HW), lambda b: (b, 0, 0)),
        compiler_params=pltpu.CompilerParams(dimension_semantics=("parallel",)),
    )(y, x, kbox)

    # forward(): (-mean(cc_R) - mean(cc_G) - mean(cc_B)) / 3 == -mean over the full cc map.
    return -jnp.mean(cc)


# --------------------------- plain-JAX reference (for checking) -------------------------

def _ncc_reference(y_true, y_pred, win=(7, 7)):
    pad = (win[0] // 2, win[1] // 2)

    def box_sum(v):
        return jax.lax.reduce_window(
            v, 0.0, jax.lax.add,
            (1, 1, win[0], win[1]), (1, 1, 1, 1),
            [(0, 0), (0, 0), (pad[0], pad[0]), (pad[1], pad[1])])

    def one(yt, yp):
        ws = float(win[0] * win[1])
        y_sum, x_sum = box_sum(yt), box_sum(yp)
        y2_sum, x2_sum, xy_sum = box_sum(yt * yt), box_sum(yp * yp), box_sum(yp * yt)
        u_y, u_x = y_sum / ws, x_sum / ws
        cross = xy_sum - u_x * y_sum - u_y * x_sum + u_y * u_x * ws
        y_var = y2_sum - 2.0 * u_y * y_sum + u_y * u_y * ws
        x_var = x2_sum - 2.0 * u_x * x_sum + u_x * u_x * ws
        cc = cross * cross / (y_var * x_var + 1e-5) * (cross / (jnp.abs(cross) + 1e-5))
        return -jnp.mean(cc)

    return (one(y_true[:, 0:1], y_pred[:, 0:1]) / 3.0
            + one(y_true[:, 1:2], y_pred[:, 1:2]) / 3.0
            + one(y_true[:, 2:3], y_pred[:, 2:3]) / 3.0)


# --------------------------------------- main -------------------------------------------

if __name__ == "__main__":
    B, C, H, W = 2, 3, 16, 16
    k1, k2 = jax.random.split(jax.random.PRNGKey(0))
    # Correlated pair (as in registration losses) so the loss is well-conditioned.
    y_true = jax.random.uniform(k1, (B, C, H, W), jnp.float32)
    y_pred = y_true + 0.1 * jax.random.normal(k2, (B, C, H, W), jnp.float32)

    loss = jax.jit(ncc_loss)(y_true, y_pred)
    jax.block_until_ready(loss)
    assert loss.shape == ()
    assert bool(jnp.isfinite(loss))

    ref = _ncc_reference(y_true, y_pred)
    assert abs(float(loss) - float(ref)) <= 3e-2 * abs(float(ref)) + 1e-4, (float(loss), float(ref))

    print("KERNEL_OK")
</pallas_src>

<mosaic_0001>
module attributes {stable_mosaic.version = 11 : i64} {
  func.func @_ncc_cc_kernel(%arg0: i32, %arg1: memref<1x3x256xf32, #tpu.memory_space<vmem>>, %arg2: memref<1x3x256xf32, #tpu.memory_space<vmem>>, %arg3: memref<256x256xf32, #tpu.memory_space<vmem>>, %arg4: memref<1x3x256xf32, #tpu.memory_space<vmem>>) attributes {dimension_semantics = [#tpu.dimension_semantics<parallel>], iteration_bounds = array<i64: 2>, scalar_prefetch = 0 : i64, scratch_operands = 0 : i64, tpu.core_type = #tpu.core_type<tc>, window_params = [{transform_indices = @transform_0, window_bounds = array<i64: 1, 3, 256>}, {transform_indices = @transform_1, window_bounds = array<i64: 1, 3, 256>}, {pipeline_mode = #tpu.pipeline_mode<synchronous>, transform_indices = @transform_2, window_bounds = array<i64: 256, 256>}, {transform_indices = @transform_3, window_bounds = array<i64: 1, 3, 256>}]} {
    %c0 = arith.constant 0 : index
    %c0_0 = arith.constant 0 : index
    %c0_1 = arith.constant 0 : index
    %0 = vector.load %arg1[%c0, %c0_0, %c0_1] : memref<1x3x256xf32, #tpu.memory_space<vmem>>, vector<1x3x256xf32>
    %1 = vector.shape_cast %0 : vector<1x3x256xf32> to vector<3x256xf32>
    %c0_2 = arith.constant 0 : index
    %c0_3 = arith.constant 0 : index
    %c0_4 = arith.constant 0 : index
    %2 = vector.load %arg2[%c0_2, %c0_3, %c0_4] : memref<1x3x256xf32, #tpu.memory_space<vmem>>, vector<1x3x256xf32>
    %3 = vector.shape_cast %2 : vector<1x3x256xf32> to vector<3x256xf32>
    %c0_5 = arith.constant 0 : index
    %c0_6 = arith.constant 0 : index
    %4 = vector.load %arg3[%c0_5, %c0_6] : memref<256x256xf32, #tpu.memory_space<vmem>>, vector<256x256xf32>
    %cst = arith.constant dense<0.000000e+00> : vector<3x256xf32>
    %5 = tpu.matmul %1, %4, %cst {dimension_numbers = #tpu.dot_dimension_numbers<[1], [0], [0], [1], [0, 0, 1, 1], [], []>} : vector<3x256xf32>, vector<256x256xf32>, vector<3x256xf32> -> vector<3x256xf32>
    %cst_7 = arith.constant dense<0.000000e+00> : vector<3x256xf32>
    %6 = tpu.matmul %3, %4, %cst_7 {dimension_numbers = #tpu.dot_dimension_numbers<[1], [0], [0], [1], [0, 0, 1, 1], [], []>} : vector<3x256xf32>, vector<256x256xf32>, vector<3x256xf32> -> vector<3x256xf32>
    %7 = arith.mulf %1, %1 : vector<3x256xf32>
    %cst_8 = arith.constant dense<0.000000e+00> : vector<3x256xf32>
    %8 = tpu.matmul %7, %4, %cst_8 {dimension_numbers = #tpu.dot_dimension_numbers<[1], [0], [0], [1], [0, 0, 1, 1], [], []>} : vector<3x256xf32>, vector<256x256xf32>, vector<3x256xf32> -> vector<3x256xf32>
    %9 = arith.mulf %3, %3 : vector<3x256xf32>
    %cst_9 = arith.constant dense<0.000000e+00> : vector<3x256xf32>
    %10 = tpu.matmul %9, %4, %cst_9 {dimension_numbers = #tpu.dot_dimension_numbers<[1], [0], [0], [1], [0, 0, 1, 1], [], []>} : vector<3x256xf32>, vector<256x256xf32>, vector<3x256xf32> -> vector<3x256xf32>
    %11 = arith.mulf %3, %1 : vector<3x256xf32>
    %cst_10 = arith.constant dense<0.000000e+00> : vector<3x256xf32>
    %12 = tpu.matmul %11, %4, %cst_10 {dimension_numbers = #tpu.dot_dimension_numbers<[1], [0], [0], [1], [0, 0, 1, 1], [], []>} : vector<3x256xf32>, vector<256x256xf32>, vector<3x256xf32> -> vector<3x256xf32>
    %cst_11 = arith.constant 0.0204081628 : f32
    %13 = vector.broadcast %cst_11 : f32 to vector<3x256xf32>
    %14 = arith.mulf %5, %13 : vector<3x256xf32>
    %cst_12 = arith.constant 0.0204081628 : f32
    %15 = vector.broadcast %cst_12 : f32 to vector<3x256xf32>
    %16 = arith.mulf %6, %15 : vector<3x256xf32>
    %17 = arith.mulf %16, %5 : vector<3x256xf32>
    %18 = arith.subf %12, %17 : vector<3x256xf32>
    %19 = arith.mulf %14, %6 : vector<3x256xf32>
    %20 = arith.subf %18, %19 : vector<3x256xf32>
    %21 = arith.mulf %14, %16 : vector<3x256xf32>
    %cst_13 = arith.constant 4.900000e+01 : f32
    %22 = vector.broadcast %cst_13 : f32 to vector<3x256xf32>
    %23 = arith.mulf %21, %22 : vector<3x256xf32>
    %24 = arith.addf %20, %23 : vector<3x256xf32>
    %cst_14 = arith.constant 2.000000e+00 : f32
    %25 = vector.broadcast %cst_14 : f32 to vector<3x256xf32>
    %26 = arith.mulf %25, %14 : vector<3x256xf32>
    %27 = arith.mulf %26, %5 : vector<3x256xf32>
    %28 = arith.subf %8, %27 : vector<3x256xf32>
    %29 = arith.mulf %14, %14 : vector<3x256xf32>
    %cst_15 = arith.constant 4.900000e+01 : f32
    %30 = vector.broadcast %cst_15 : f32 to vector<3x256xf32>
    %31 = arith.mulf %29, %30 : vector<3x256xf32>
    %32 = arith.addf %28, %31 : vector<3x256xf32>
    %cst_16 = arith.constant 2.000000e+00 : f32
    %33 = vector.broadcast %cst_16 : f32 to vector<3x256xf32>
    %34 = arith.mulf %33, %16 : vector<3x256xf32>
    %35 = arith.mulf %34, %6 : vector<3x256xf32>
    %36 = arith.subf %10, %35 : vector<3x256xf32>
    %37 = arith.mulf %16, %16 : vector<3x256xf32>
    %cst_17 = arith.constant 4.900000e+01 : f32
    %38 = vector.broadcast %cst_17 : f32 to vector<3x256xf32>
    %39 = arith.mulf %37, %38 : vector<3x256xf32>
    %40 = arith.addf %36, %39 : vector<3x256xf32>
    %41 = arith.mulf %24, %24 : vector<3x256xf32>
    %42 = arith.mulf %32, %40 : vector<3x256xf32>
    %cst_18 = arith.constant 9.99999974E-6 : f32
    %43 = vector.broadcast %cst_18 : f32 to vector<3x256xf32>
    %44 = arith.addf %42, %43 : vector<3x256xf32>
    %45 = arith.divf %41, %44 : vector<3x256xf32>
    %46 = math.absf %24 : vector<3x256xf32>
    %cst_19 = arith.constant 9.99999974E-6 : f32
    %47 = vector.broadcast %cst_19 : f32 to vector<3x256xf32>
    %48 = arith.addf %46, %47 : vector<3x256xf32>
    %49 = arith.divf %24, %48 : vector<3x256xf32>
    %50 = arith.mulf %45, %49 : vector<3x256xf32>
    %c0_20 = arith.constant 0 : index
    %c0_21 = arith.constant 0 : index
    %c0_22 = arith.constant 0 : index
    %51 = vector.load %arg4[%c0_20, %c0_21, %c0_22] : memref<1x3x256xf32, #tpu.memory_space<vmem>>, vector<1x3x256xf32>
    %52 = vector.shape_cast %51 : vector<1x3x256xf32> to vector<3x256xf32>
    %53 = vector.shape_cast %50 : vector<3x256xf32> to vector<1x3x256xf32>
    tpu.vector_store %arg4[%c0_20, %c0_21, %c0_22], %53 {strides = array<i32>} : memref<1x3x256xf32, #tpu.memory_space<vmem>>, vector<1x3x256xf32>,
    return
  }
  func.func @transform_0(%arg0: i32) -> (i32, i32, i32) {
    %c0_i32 = arith.constant 0 : i32
    %c0_i32_0 = arith.constant 0 : i32
    %c0_i32_1 = arith.constant 0 : i32
    return %arg0, %c0_i32, %c0_i32_0 : i32, i32, i32
  }
  func.func @transform_1(%arg0: i32) -> (i32, i32, i32) {
    %c0_i32 = arith.constant 0 : i32
    %c0_i32_0 = arith.constant 0 : i32
    %c0_i32_1 = arith.constant 0 : i32
    return %arg0, %c0_i32, %c0_i32_0 : i32, i32, i32
  }
  func.func @transform_2(%arg0: i32) -> (i32, i32) {
    %c0_i32 = arith.constant 0 : i32
    %c0_i32_0 = arith.constant 0 : i32
    %c0_i32_1 = arith.constant 0 : i32
    return %c0_i32, %c0_i32_0 : i32, i32
  }
  func.func @transform_3(%arg0: i32) -> (i32, i32, i32) {
    %c0_i32 = arith.constant 0 : i32
    %c0_i32_0 = arith.constant 0 : i32
    %c0_i32_1 = arith.constant 0 : i32
    return %arg0, %c0_i32, %c0_i32_0 : i32, i32, i32
  }
}

</mosaic_0001>

<llo_original>
// kernel: ncc_loss.1
$region0: #{ncc_loss.1}
  #allocation0 [shape = 'u32[]', space=smem, size = 0x4, offset = 0x4, fixed_abs, tag = 'smem constant byte address 0x4 - core index']
  #allocation1 [shape = 'u32[144,128]{1,0:T(1,128)}', space=vmem, size = 0x12000, scoped, tag = 'internal scratch']
  %s0 = inlined_call_operand.vmem [shape: f32[2,3,256], index: 0, kind: input, shape index: {}]
  %s1 = inlined_call_operand.vmem [shape: f32[2,3,256], index: 1, kind: input, shape index: {}]
  %s2 = inlined_call_operand.vmem [shape: f32[256,256], index: 2, kind: input, shape index: {}]
  %s3 = inlined_call_operand.vmem [shape: f32[2,3,256], index: 3, kind: output, shape index: {}]
  %s4 = sld [smem:[#allocation0]]
  $region45: #{ncc_loss.1} parent=0
    _
  %s6 = ssub.s32 1, %s4
  %s7 = scalar_select 0, %s6, %s4
  loop: start=0, step=1, limit=4
  $region2: #{ncc_loss.1} parent=0 // loop_pre_header
    _
  $region3: #{ncc_loss.1} parent=0 // loop_header
    %s9 = sphi 0, %s13
    %p10 = scmp.ge.s32.totalorder %s9, 4
    %s19 = sphi 0, %s21
    %s22 = sphi 0, %s19
    %s23 = sphi 0, %s22
    %s39 = sphi 0, %s23
    %s45 = sphi 0, %s47
    %s48 = sphi 0, %s45
    %s49 = sphi 0, %s48
    %s65 = sphi 0, %s49
    %s69 = sphi 0, %s69
    %s71 = sphi 0, %s69
    %s72 = sphi 0, %s71
    %s86 = sphi 0, %s72
    %s92 = sphi 0, %s94
    %s95 = sphi 0, %s92
    %s96 = sphi 0, %s95
    %s112 = sphi 0, %s96
  $region4: #{ncc_loss.1} parent=0 // loop_header_branch
    %12 = sbr.rel (%p10) target = $region8
  $region5: #{ncc_loss.1} parent=0 // loop_body
    %s14 = ssub.s32 %s9, 1
    %s15 = ssub.s32 %s9, 2
    %s16 = sadd.s32 %s9, 1
    %s17 = ssub.s32 %s9, %s16
    %p18 = scmp.eq.s32.totalorder %s17, 0
    %s20 = sadd.s32 %s19, 1
    %s21 = scalar_select %p18, %s19, %s20
    %p24 = pneg %p18
    %p25 = scmp.eq.s32.totalorder %s9, 1
    %p26 = por %p24, %p25
    %p27 = scmp.ne.s32.totalorder %s19, %s22
    %p28 = scmp.eq.s32.totalorder %s9, 0
    %p29 = por %p27, %p28
    %p30 = scmp.ne.s32.totalorder %s19, %s22
    %p31 = scmp.eq.s32.totalorder %s14, 1
    %p32 = por %p30, %p31
    %p33 = scmp.ne.s32.totalorder %s22, %s23
    %p34 = scmp.eq.s32.totalorder %s14, 0
    %p35 = por %p33, %p34
    %p36 = scmp.ne.s32.totalorder %s22, %s23
    %p37 = scmp.eq.s32.totalorder %s15, 1
    %p38 = por %p36, %p37
    %p40 = scmp.ne.s32.totalorder %s23, %s39
    %p41 = scmp.eq.s32.totalorder %s15, 0
    %p42 = por %p40, %p41
    %s43 = ssub.s32 %s9, %s16
    %p44 = scmp.eq.s32.totalorder %s43, 0
    %s46 = sadd.s32 %s45, 1
    %s47 = scalar_select %p44, %s45, %s46
    %p50 = pneg %p44
    %p51 = scmp.eq.s32.totalorder %s9, 1
    %p52 = por %p50, %p51
    %p53 = scmp.ne.s32.totalorder %s45, %s48
    %p54 = scmp.eq.s32.totalorder %s9, 0
    %p55 = por %p53, %p54
    %p56 = scmp.ne.s32.totalorder %s45, %s48
    %p57 = scmp.eq.s32.totalorder %s14, 1
    %p58 = por %p56, %p57
    %p59 = scmp.ne.s32.totalorder %s48, %s49
    %p60 = scmp.eq.s32.totalorder %s14, 0
    %p61 = por %p59, %p60
    %p62 = scmp.ne.s32.totalorder %s48, %s49
    %p63 = scmp.eq.s32.totalorder %s15, 1
    %p64 = por %p62, %p63
    %p66 = scmp.ne.s32.totalorder %s49, %s65
    %p67 = scmp.eq.s32.totalorder %s15, 0
    %p68 = por %p66, %p67
    %s70 = sadd.s32 %s69, 1
    %p73 = scmp.eq.s32.totalorder %s9, 1
    %p74 = scmp.ne.s32.totalorder %s69, %s71
    %p75 = scmp.eq.s32.totalorder %s9, 0
    %p76 = por %p74, %p75
    %p77 = scmp.ne.s32.totalorder %s69, %s71
    %p78 = scmp.eq.s32.totalorder %s14, 1
    %p79 = por %p77, %p78
    %p80 = scmp.ne.s32.totalorder %s71, %s72
    %p81 = scmp.eq.s32.totalorder %s14, 0
    %p82 = por %p80, %p81
    %p83 = scmp.ne.s32.totalorder %s71, %s72
    %p84 = scmp.eq.s32.totalorder %s15, 1
    %p85 = por %p83, %p84
    %p87 = scmp.ne.s32.totalorder %s72, %s86
    %p88 = scmp.eq.s32.totalorder %s15, 0
    %p89 = por %p87, %p88
    %s90 = ssub.s32 %s9, %s16
    %p91 = scmp.eq.s32.totalorder %s90, 0
    %s93 = sadd.s32 %s92, 1
    %s94 = scalar_select %p91, %s92, %s93
    %p97 = pneg %p91
    %p98 = scmp.eq.s32.totalorder %s9, 1
    %p99 = por %p97, %p98
    %p100 = scmp.ne.s32.totalorder %s92, %s95
    %p101 = scmp.eq.s32.totalorder %s9, 0
    %p102 = por %p100, %p101
    %p103 = scmp.ne.s32.totalorder %s92, %s95
    %p104 = scmp.eq.s32.totalorder %s14, 1
    %p105 = por %p103, %p104
    %p106 = scmp.ne.s32.totalorder %s95, %s96
    %p107 = scmp.eq.s32.totalorder %s14, 0
    %p108 = por %p106, %p107
    %p109 = scmp.ne.s32.totalorder %s95, %s96
    %p110 = scmp.eq.s32.totalorder %s15, 1
    %p111 = por %p109, %p110
    %p113 = scmp.ne.s32.totalorder %s96, %s112
    %p114 = scmp.eq.s32.totalorder %s15, 0
    %p115 = por %p113, %p114
    %p116 = scmp.le.s32.totalorder 1, %s9
    %p117 = scmp.lt.s32.totalorder %s9, 3
    %p118 = pnand %p116, %p117
    %p119 = pneg %p118
    // Predicated region
    $region9: #{ncc_loss.1} parent=5 // pred_check
      _
    $region10: #{ncc_loss.1} parent=5 // pred_check_branch
      %121 = sbr.rel (%p118) target = $region12
    $region11: #{ncc_loss.1} parent=5 // pred_region
      %s122 = ssub.s32 %s9, 1
      // Predicated region
      $region13: #{ncc_loss.1} parent=11 // pred_check
        %p123 = pneg %p82
      $region14: #{ncc_loss.1} parent=11 // pred_check_branch
        %125 = sbr.rel (%p123) target = $region16
      $region15: #{ncc_loss.1} parent=11 // pred_region
        _
      $region16: #{ncc_loss.1} parent=11 // pred_fallthru
        _
    $region12: #{ncc_loss.1} parent=5 // pred_fallthru
      _
    %p126 = scmp.lt.s32.totalorder %s9, 2
    // Predicated region
    $region17: #{ncc_loss.1} parent=5 // pred_check
      %p127 = pneg %p126
    $region18: #{ncc_loss.1} parent=5 // pred_check_branch
      %129 = sbr.rel (%p127) target = $region20
    $region19: #{ncc_loss.1} parent=5 // pred_region
      // Predicated region
      $region21: #{ncc_loss.1} parent=19 // pred_check
        %p130 = pneg %p29
      $region22: #{ncc_loss.1} parent=19 // pred_check_branch
        %132 = sbr.rel (%p130) target = $region24
      $region23: #{ncc_loss.1} parent=19 // pred_region
        %p133 = scmp.lt.s32.totalorder %s9, 1
        %s134 = scalar_select %p133, %s9, 1
        %s135 = smul.addr %s134, 2
        %s136 = smul.addr %s135, 4
        %s137 = scalar_lea.vmem %s0, %s136
      $region24: #{ncc_loss.1} parent=19 // pred_fallthru
        _
      // Predicated region
      $region25: #{ncc_loss.1} parent=19 // pred_check
        %p138 = pneg %p55
      $region26: #{ncc_loss.1} parent=19 // pred_check_branch
        %140 = sbr.rel (%p138) target = $region28
      $region27: #{ncc_loss.1} parent=19 // pred_region
        %p141 = scmp.lt.s32.totalorder %s9, 1
        %s142 = scalar_select %p141, %s9, 1
        %s143 = smul.addr %s142, 2
        %s144 = smul.addr %s143, 4
        %s145 = scalar_lea.vmem %s1, %s144
      $region28: #{ncc_loss.1} parent=19 // pred_fallthru
        _
    $region20: #{ncc_loss.1} parent=5 // pred_fallthru
      _
    %p146 = scmp.le.s32.totalorder 1, %s9
    %p147 = scmp.lt.s32.totalorder %s9, 3
    %p148 = pnand %p146, %p147
    %p149 = pneg %p148
    // Predicated region
    $region29: #{ncc_loss.1} parent=5 // pred_check
      _
    $region30: #{ncc_loss.1} parent=5 // pred_check_branch
      %151 = sbr.rel (%p148) target = $region32
    $region31: #{ncc_loss.1} parent=5 // pred_region
      %s152 = ssub.s32 %s9, 1
      %p153 = scmp.lt.s32.totalorder %s14, 1
      %s154 = scalar_select %p153, %s14, 1
      %s155 = smul.addr %s154, 2
      %s156 = smul.addr %s155, 4
      %s157 = scalar_lea.vmem %s0, %s156
      %p158 = pneg %p35
      %p159 = pneg %p32
      %p160 = scmp.lt.s32.totalorder %s14, 1
      %s161 = scalar_select %p160, %s14, 1
      %s162 = smul.addr %s161, 2
      %s163 = smul.addr %s162, 4
      %s164 = scalar_lea.vmem %s1, %s163
      %p165 = pneg %p61
      %p166 = pneg %p58
      %p167 = pneg %p82
      %p168 = pneg %p79
      %p169 = pneg %p108
      %p170 = pneg %p105
      %p171 = scmp.lt.s32.totalorder %s14, 1
      %s172 = scalar_select %p171, %s14, 1
      %s173 = smul.addr %s172, 2
      %s174 = smul.addr %s173, 4
      %s175 = scalar_lea.vmem %s3, %s174
      %p176 = scmp.lt.s32.totalorder %s14, 1
      %s177 = scalar_select %p176, %s14, 1
      %s178 = smul.addr %s177, 2
      %s179 = smul.addr %s178, 4
      %s180 = scalar_lea.vmem %s0, %s179
      %p181 = scmp.lt.s32.totalorder %s14, 1
      %s182 = scalar_select %p181, %s14, 1
      %s183 = smul.addr %s182, 2
      %s184 = smul.addr %s183, 4
      %s185 = scalar_lea.vmem %s1, %s184
      %p186 = scmp.lt.s32.totalorder %s14, 1
      %s187 = scalar_select %p186, %s14, 1
      %s188 = smul.addr %s187, 2
      %s189 = smul.addr %s188, 4
      %s190 = scalar_lea.vmem %s3, %s189
      %v191 = vld [vmem:[%s180] sm:$0x77]
      %v192 = vld [vmem:[%s185] sm:$0x77]
      %v193 = vld [vmem:[%s2] sm:$0xff]
      %v194 = vld [vmem:[%s2 + $0x8] sm:$0xff]
      %v195 = vld [vmem:[%s2 + $0x10] sm:$0xff]
      %v196 = vld [vmem:[%s2 + $0x18] sm:$0xff]
      %v197 = vld [vmem:[%s2 + $0x20] sm:$0xff]
      %v198 = vld [vmem:[%s2 + $0x28] sm:$0xff]
      %v199 = vld [vmem:[%s2 + $0x30] sm:$0xff]
      %v200 = vld [vmem:[%s2 + $0x38] sm:$0xff]
      %v201 = vld [vmem:[%s2 + $0x40] sm:$0xff]
      %v202 = vld [vmem:[%s2 + $0x48] sm:$0xff]
      %v203 = vld [vmem:[%s2 + $0x50] sm:$0xff]
      %v204 = vld [vmem:[%s2 + $0x58] sm:$0xff]
      %v205 = vld [vmem:[%s2 + $0x60] sm:$0xff]
      %v206 = vld [vmem:[%s2 + $0x68] sm:$0xff]
      %v207 = vld [vmem:[%s2 + $0x70] sm:$0xff]
      %v208 = vld [vmem:[%s2 + $0x78] sm:$0xff]
      %v209 = vld [vmem:[%s2 + $0x80] sm:$0xff]
      %v210 = vld [vmem:[%s2 + $0x88] sm:$0xff]
      %v211 = vld [vmem:[%s2 + $0x90] sm:$0xff]
      %v212 = vld [vmem:[%s2 + $0x98] sm:$0xff]
      %v213 = vld [vmem:[%s2 + $0xa0] sm:$0xff]
      %v214 = vld [vmem:[%s2 + $0xa8] sm:$0xff]
      %v215 = vld [vmem:[%s2 + $0xb0] sm:$0xff]
      %v216 = vld [vmem:[%s2 + $0xb8] sm:$0xff]
      %v217 = vld [vmem:[%s2 + $0xc0] sm:$0xff]
      %v218 = vld [vmem:[%s2 + $0xc8] sm:$0xff]
      %v219 = vld [vmem:[%s2 + $0xd0] sm:$0xff]
      %v220 = vld [vmem:[%s2 + $0xd8] sm:$0xff]
      %v221 = vld [vmem:[%s2 + $0xe0] sm:$0xff]
      %v222 = vld [vmem:[%s2 + $0xe8] sm:$0xff]
      %v223 = vld [vmem:[%s2 + $0xf0] sm:$0xff]
      %v224 = vld [vmem:[%s2 + $0xf8] sm:$0xff]
      %v225 = vld [vmem:[%s2 + $0x100] sm:$0xff]
      %v226 = vld [vmem:[%s2 + $0x108] sm:$0xff]
      %v227 = vld [vmem:[%s2 + $0x110] sm:$0xff]
      %v228 = vld [vmem:[%s2 + $0x118] sm:$0xff]
      %v229 = vld [vmem:[%s2 + $0x120] sm:$0xff]
      %v230 = vld [vmem:[%s2 + $0x128] sm:$0xff]
      %v231 = vld [vmem:[%s2 + $0x130] sm:$0xff]
      %v232 = vld [vmem:[%s2 + $0x138] sm:$0xff]
      %v233 = vld [vmem:[%s2 + $0x140] sm:$0xff]
      %v234 = vld [vmem:[%s2 + $0x148] sm:$0xff]
      %v235 = vld [vmem:[%s2 + $0x150] sm:$0xff]
      %v236 = vld [vmem:[%s2 + $0x158] sm:$0xff]
      %v237 = vld [vmem:[%s2 + $0x160] sm:$0xff]
      %v238 = vld [vmem:[%s2 + $0x168] sm:$0xff]
      %v239 = vld [vmem:[%s2 + $0x170] sm:$0xff]
      %v240 = vld [vmem:[%s2 + $0x178] sm:$0xff]
      %v241 = vld [vmem:[%s2 + $0x180] sm:$0xff]
      %v242 = vld [vmem:[%s2 + $0x188] sm:$0xff]
      %v243 = vld [vmem:[%s2 + $0x190] sm:$0xff]
      %v244 = vld [vmem:[%s2 + $0x198] sm:$0xff]
      %v245 = vld [vmem:[%s2 + $0x1a0] sm:$0xff]
      %v246 = vld [vmem:[%s2 + $0x1a8] sm:$0xff]
      %v247 = vld [vmem:[%s2 + $0x1b0] sm:$0xff]
      %v248 = vld [vmem:[%s2 + $0x1b8] sm:$0xff]
      %v249 = vld [vmem:[%s2 + $0x1c0] sm:$0xff]
      %v250 = vld [vmem:[%s2 + $0x1c8] sm:$0xff]
      %v251 = vld [vmem:[%s2 + $0x1d0] sm:$0xff]
      %v252 = vld [vmem:[%s2 + $0x1d8] sm:$0xff]
      %v253 = vld [vmem:[%s2 + $0x1e0] sm:$0xff]
      %v254 = vld [vmem:[%s2 + $0x1e8] sm:$0xff]
      %v255 = vld [vmem:[%s2 + $0x1f0] sm:$0xff]
      %v256 = vld [vmem:[%s2 + $0x1f8] sm:$0xff]
      %v258 = vcombine.high %v191, %v191
      %260 = vmatprep.subr.mxu0 %v194
      %261 = vmatpush1.msra.mxu0 %v193
      %262 = vmatprep.subr.mxu0 %v196
      %263 = vmatpush1.msra.mxu0 %v195
      %264 = vmatprep.subr.mxu0 %v198
      %265 = vmatpush1.msra.mxu0 %v197
      %266 = vmatprep.subr.mxu0 %v200
      %267 = vmatpush1.msra.mxu0 %v199
      %268 = vmatprep.subr.mxu0 %v202
      %269 = vmatpush1.msra.mxu0 %v201
      %270 = vmatprep.subr.mxu0 %v204
      %271 = vmatpush1.msra.mxu0 %v203
      %272 = vmatprep.subr.mxu0 %v206
      %273 = vmatpush1.msra.mxu0 %v205
      %274 = vmatprep.subr.mxu0 %v208
      %275 = vmatpush1.msra.mxu0 %v207
      %276 = vmatprep.subr.mxu0 %v210
      %277 = vmatpush1.msra.mxu0 %v209
      %278 = vmatprep.subr.mxu0 %v212
      %279 = vmatpush1.msra.mxu0 %v211
      %280 = vmatprep.subr.mxu0 %v214
      %281 = vmatpush1.msra.mxu0 %v213
      %282 = vmatprep.subr.mxu0 %v216
      %283 = vmatpush1.msra.mxu0 %v215
      %284 = vmatprep.subr.mxu0 %v218
      %285 = vmatpush1.msra.mxu0 %v217
      %286 = vmatprep.subr.mxu0 %v220
      %287 = vmatpush1.msra.mxu0 %v219
      %288 = vmatprep.subr.mxu0 %v222
      %289 = vmatpush1.msra.mxu0 %v221
      %290 = vmatprep.subr.mxu0 %v224
      %291 = vmatpush1.msra.mxu0 %v223
      %292 = vmatprep.subr.mxu0 %v226
      %293 = vmatpush1.msra.mxu0 %v225
      %294 = vmatprep.subr.mxu0 %v228
      %295 = vmatpush1.msra.mxu0 %v227
      %296 = vmatprep.subr.mxu0 %v230
      %297 = vmatpush1.msra.mxu0 %v229
      %298 = vmatprep.subr.mxu0 %v232
      %299 = vmatpush1.msra.mxu0 %v231
      %300 = vmatprep.subr.mxu0 %v234
      %301 = vmatpush1.msra.mxu0 %v233
      %302 = vmatprep.subr.mxu0 %v236
      %303 = vmatpush1.msra.mxu0 %v235
      %304 = vmatprep.subr.mxu0 %v238
      %305 = vmatpush1.msra.mxu0 %v237
      %306 = vmatprep.subr.mxu0 %v240
      %307 = vmatpush1.msra.mxu0 %v239
      %308 = vmatprep.subr.mxu0 %v242
      %309 = vmatpush1.msra.mxu0 %v241
      %310 = vmatprep.subr.mxu0 %v244
      %311 = vmatpush1.msra.mxu0 %v243
      %312 = vmatprep.subr.mxu0 %v246
      %313 = vmatpush1.msra.mxu0 %v245
      %314 = vmatprep.subr.mxu0 %v248
      %315 = vmatpush1.msra.mxu0 %v247
      %316 = vmatprep.subr.mxu0 %v250
      %317 = vmatpush1.msra.mxu0 %v249
      %318 = vmatprep.subr.mxu0 %v252
      %319 = vmatpush1.msra.mxu0 %v251
      %320 = vmatprep.subr.mxu0 %v254
      %321 = vmatpush1.msra.mxu0 %v253
      %322 = vmatprep.subr.mxu0 %v256
      %323 = vmatpush1.msra.mxu0 %v255
      %324 = vmatprep.mubr.f32.mxu0 %v258
      %325 = vmatmul.mubr.f32.gmra.mrb[0].mxu0 %v191
      %v326 = vpop.f32.mrb[0].mxu0
      %v327 = vadd.f32 0.0, %v326
      %v328 = vpop.f32.mrb[0].mxu0
      %v329 = vadd.f32 0.0, %v328
      %330 = vdwg.mxu0
      %v332 = vcombine.high %v192, %v192
      %334 = vmatprep.subr.mxu0 %v194
      %335 = vmatpush1.msra.mxu0 %v193
      %336 = vmatprep.subr.mxu0 %v196
      %337 = vmatpush1.msra.mxu0 %v195
      %338 = vmatprep.subr.mxu0 %v198
      %339 = vmatpush1.msra.mxu0 %v197
      %340 = vmatprep.subr.mxu0 %v200
      %341 = vmatpush1.msra.mxu0 %v199
      %342 = vmatprep.subr.mxu0 %v202
      %343 = vmatpush1.msra.mxu0 %v201
      %344 = vmatprep.subr.mxu0 %v204
      %345 = vmatpush1.msra.mxu0 %v203
      %346 = vmatprep.subr.mxu0 %v206
      %347 = vmatpush1.msra.mxu0 %v205
      %348 = vmatprep.subr.mxu0 %v208
      %349 = vmatpush1.msra.mxu0 %v207
      %350 = vmatprep.subr.mxu0 %v210
      %351 = vmatpush1.msra.mxu0 %v209
      %352 = vmatprep.subr.mxu0 %v212
      %353 = vmatpush1.msra.mxu0 %v211
      %354 = vmatprep.subr.mxu0 %v214
      %355 = vmatpush1.msra.mxu0 %v213
      %356 = vmatprep.subr.mxu0 %v216
      %357 = vmatpush1.msra.mxu0 %v215
      %358 = vmatprep.subr.mxu0 %v218
      %359 = vmatpush1.msra.mxu0 %v217
      %360 = vmatprep.subr.mxu0 %v220
      %361 = vmatpush1.msra.mxu0 %v219
      %362 = vmatprep.subr.mxu0 %v222
      %363 = vmatpush1.msra.mxu0 %v221
      %364 = vmatprep.subr.mxu0 %v224
      %365 = vmatpush1.msra.mxu0 %v223
      %366 = vmatprep.subr.mxu0 %v226
      %367 = vmatpush1.msra.mxu0 %v225
      %368 = vmatprep.subr.mxu0 %v228
      %369 = vmatpush1.msra.mxu0 %v227
      %370 = vmatprep.subr.mxu0 %v230
      %371 = vmatpush1.msra.mxu0 %v229
      %372 = vmatprep.subr.mxu0 %v232
      %373 = vmatpush1.msra.mxu0 %v231
      %374 = vmatprep.subr.mxu0 %v234
      %375 = vmatpush1.msra.mxu0 %v233
      %376 = vmatprep.subr.mxu0 %v236
      %377 = vmatpush1.msra.mxu0 %v235
      %378 = vmatprep.subr.mxu0 %v238
      %379 = vmatpush1.msra.mxu0 %v237
      %380 = vmatprep.subr.mxu0 %v240
      %381 = vmatpush1.msra.mxu0 %v239
      %382 = vmatprep.subr.mxu0 %v242
      %383 = vmatpush1.msra.mxu0 %v241
      %384 = vmatprep.subr.mxu0 %v244
      %385 = vmatpush1.msra.mxu0 %v243
      %386 = vmatprep.subr.mxu0 %v246
      %387 = vmatpush1.msra.mxu0 %v245
      %388 = vmatprep.subr.mxu0 %v248
      %389 = vmatpush1.msra.mxu0 %v247
      %390 = vmatprep.subr.mxu0 %v250
      %391 = vmatpush1.msra.mxu0 %v249
      %392 = vmatprep.subr.mxu0 %v252
      %393 = vmatpush1.msra.mxu0 %v251
      %394 = vmatprep.subr.mxu0 %v254
      %395 = vmatpush1.msra.mxu0 %v253
      %396 = vmatprep.subr.mxu0 %v256
      %397 = vmatpush1.msra.mxu0 %v255
      %398 = vmatprep.mubr.f32.mxu0 %v332
      %399 = vmatmul.mubr.f32.gmra.mrb[0].mxu0 %v192
      %v400 = vpop.f32.mrb[0].mxu0
      %v401 = vadd.f32 0.0, %v400
      %v402 = vpop.f32.mrb[0].mxu0
      %v403 = vadd.f32 0.0, %v402
      %404 = vdwg.mxu0
      %v405 = vmul.f32 %v191, %v191
      %v407 = vcombine.high %v405, %v405
      %409 = vmatprep.subr.mxu0 %v194
      %410 = vmatpush1.msra.mxu0 %v193
      %411 = vmatprep.subr.mxu0 %v196
      %412 = vmatpush1.msra.mxu0 %v195
      %413 = vmatprep.subr.mxu0 %v198
      %414 = vmatpush1.msra.mxu0 %v197
      %415 = vmatprep.subr.mxu0 %v200
      %416 = vmatpush1.msra.mxu0 %v199
      %417 = vmatprep.subr.mxu0 %v202
      %418 = vmatpush1.msra.mxu0 %v201
      %419 = vmatprep.subr.mxu0 %v204
      %420 = vmatpush1.msra.mxu0 %v203
      %421 = vmatprep.subr.mxu0 %v206
      %422 = vmatpush1.msra.mxu0 %v205
      %423 = vmatprep.subr.mxu0 %v208
      %424 = vmatpush1.msra.mxu0 %v207
      %425 = vmatprep.subr.mxu0 %v210
      %426 = vmatpush1.msra.mxu0 %v209
      %427 = vmatprep.subr.mxu0 %v212
      %428 = vmatpush1.msra.mxu0 %v211
      %429 = vmatprep.subr.mxu0 %v214
      %430 = vmatpush1.msra.mxu0 %v213
      %431 = vmatprep.subr.mxu0 %v216
      %432 = vmatpush1.msra.mxu0 %v215
      %433 = vmatprep.subr.mxu0 %v218
      %434 = vmatpush1.msra.mxu0 %v217
      %435 = vmatprep.subr.mxu0 %v220
      %436 = vmatpush1.msra.mxu0 %v219
      %437 = vmatprep.subr.mxu0 %v222
      %438 = vmatpush1.msra.mxu0 %v221
      %439 = vmatprep.subr.mxu0 %v224
      %440 = vmatpush1.msra.mxu0 %v223
      %441 = vmatprep.subr.mxu0 %v226
      %442 = vmatpush1.msra.mxu0 %v225
      %443 = vmatprep.subr.mxu0 %v228
      %444 = vmatpush1.msra.mxu0 %v227
      %445 = vmatprep.subr.mxu0 %v230
      %446 = vmatpush1.msra.mxu0 %v229
      %447 = vmatprep.subr.mxu0 %v232
      %448 = vmatpush1.msra.mxu0 %v231
      %449 = vmatprep.subr.mxu0 %v234
      %450 = vmatpush1.msra.mxu0 %v233
      %451 = vmatprep.subr.mxu0 %v236
      %452 = vmatpush1.msra.mxu0 %v235
      %453 = vmatprep.subr.mxu0 %v238
      %454 = vmatpush1.msra.mxu0 %v237
      %455 = vmatprep.subr.mxu0 %v240
      %456 = vmatpush1.msra.mxu0 %v239
      %457 = vmatprep.subr.mxu0 %v242
      %458 = vmatpush1.msra.mxu0 %v241
      %459 = vmatprep.subr.mxu0 %v244
      %460 = vmatpush1.msra.mxu0 %v243
      %461 = vmatprep.subr.mxu0 %v246
      %462 = vmatpush1.msra.mxu0 %v245
      %463 = vmatprep.subr.mxu0 %v248
      %464 = vmatpush1.msra.mxu0 %v247
      %465 = vmatprep.subr.mxu0 %v250
      %466 = vmatpush1.msra.mxu0 %v249
      %467 = vmatprep.subr.mxu0 %v252
      %468 = vmatpush1.msra.mxu0 %v251
      %469 = vmatprep.subr.mxu0 %v254
      %470 = vmatpush1.msra.mxu0 %v253
      %471 = vmatprep.subr.mxu0 %v256
      %472 = vmatpush1.msra.mxu0 %v255
      %473 = vmatprep.mubr.f32.mxu0 %v407
      %474 = vmatmul.mubr.f32.gmra.mrb[0].mxu0 %v405
      %v475 = vpop.f32.mrb[0].mxu0
      %v476 = vadd.f32 0.0, %v475
      %v477 = vpop.f32.mrb[0].mxu0
      %v478 = vadd.f32 0.0, %v477
      %479 = vdwg.mxu0
      %v480 = vmul.f32 %v192, %v192
      %v482 = vcombine.high %v480, %v480
      %484 = vmatprep.subr.mxu0 %v194
      %485 = vmatpush1.msra.mxu0 %v193
      %486 = vmatprep.subr.mxu0 %v196
      %487 = vmatpush1.msra.mxu0 %v195
      %488 = vmatprep.subr.mxu0 %v198
      %489 = vmatpush1.msra.mxu0 %v197
      %490 = vmatprep.subr.mxu0 %v200
      %491 = vmatpush1.msra.mxu0 %v199
      %492 = vmatprep.subr.mxu0 %v202
      %493 = vmatpush1.msra.mxu0 %v201
      %494 = vmatprep.subr.mxu0 %v204
      %495 = vmatpush1.msra.mxu0 %v203
      %496 = vmatprep.subr.mxu0 %v206
      %497 = vmatpush1.msra.mxu0 %v205
      %498 = vmatprep.subr.mxu0 %v208
      %499 = vmatpush1.msra.mxu0 %v207
      %500 = vmatprep.subr.mxu0 %v210
      %501 = vmatpush1.msra.mxu0 %v209
      %502 = vmatprep.subr.mxu0 %v212
      %503 = vmatpush1.msra.mxu0 %v211
      %504 = vmatprep.subr.mxu0 %v214
      %505 = vmatpush1.msra.mxu0 %v213
      %506 = vmatprep.subr.mxu0 %v216
      %507 = vmatpush1.msra.mxu0 %v215
      %508 = vmatprep.subr.mxu0 %v218
      %509 = vmatpush1.msra.mxu0 %v217
      %510 = vmatprep.subr.mxu0 %v220
      %511 = vmatpush1.msra.mxu0 %v219
      %512 = vmatprep.subr.mxu0 %v222
      %513 = vmatpush1.msra.mxu0 %v221
      %514 = vmatprep.subr.mxu0 %v224
      %515 = vmatpush1.msra.mxu0 %v223
      %516 = vmatprep.subr.mxu0 %v226
      %517 = vmatpush1.msra.mxu0 %v225
      %518 = vmatprep.subr.mxu0 %v228
      %519 = vmatpush1.msra.mxu0 %v227
      %520 = vmatprep.subr.mxu0 %v230
      %521 = vmatpush1.msra.mxu0 %v229
      %522 = vmatprep.subr.mxu0 %v232
      %523 = vmatpush1.msra.mxu0 %v231
      %524 = vmatprep.subr.mxu0 %v234
      %525 = vmatpush1.msra.mxu0 %v233
      %526 = vmatprep.subr.mxu0 %v236
      %527 = vmatpush1.msra.mxu0 %v235
      %528 = vmatprep.subr.mxu0 %v238
      %529 = vmatpush1.msra.mxu0 %v237
      %530 = vmatprep.subr.mxu0 %v240
      %531 = vmatpush1.msra.mxu0 %v239
      %532 = vmatprep.subr.mxu0 %v242
      %533 = vmatpush1.msra.mxu0 %v241
      %534 = vmatprep.subr.mxu0 %v244
      %535 = vmatpush1.msra.mxu0 %v243
      %536 = vmatprep.subr.mxu0 %v246
      %537 = vmatpush1.msra.mxu0 %v245
      %538 = vmatprep.subr.mxu0 %v248
      %539 = vmatpush1.msra.mxu0 %v247
      %540 = vmatprep.subr.mxu0 %v250
      %541 = vmatpush1.msra.mxu0 %v249
      %542 = vmatprep.subr.mxu0 %v252
      %543 = vmatpush1.msra.mxu0 %v251
      %544 = vmatprep.subr.mxu0 %v254
      %545 = vmatpush1.msra.mxu0 %v253
      %546 = vmatprep.subr.mxu0 %v256
      %547 = vmatpush1.msra.mxu0 %v255
      %548 = vmatprep.mubr.f32.mxu0 %v482
      %549 = vmatmul.mubr.f32.gmra.mrb[0].mxu0 %v480
      %v550 = vpop.f32.mrb[0].mxu0
      %v551 = vadd.f32 0.0, %v550
      %v552 = vpop.f32.mrb[0].mxu0
      %v553 = vadd.f32 0.0, %v552
      %554 = vdwg.mxu0
      %v555 = vmul.f32 %v192, %v191
      %v557 = vcombine.high %v555, %v555
      %559 = vmatprep.subr.mxu0 %v194
      %560 = vmatpush1.msra.mxu0 %v193
      %561 = vmatprep.subr.mxu0 %v196
      %562 = vmatpush1.msra.mxu0 %v195
      %563 = vmatprep.subr.mxu0 %v198
      %564 = vmatpush1.msra.mxu0 %v197
      %565 = vmatprep.subr.mxu0 %v200
      %566 = vmatpush1.msra.mxu0 %v199
      %567 = vmatprep.subr.mxu0 %v202
      %568 = vmatpush1.msra.mxu0 %v201
      %569 = vmatprep.subr.mxu0 %v204
      %570 = vmatpush1.msra.mxu0 %v203
      %571 = vmatprep.subr.mxu0 %v206
      %572 = vmatpush1.msra.mxu0 %v205
      %573 = vmatprep.subr.mxu0 %v208
      %574 = vmatpush1.msra.mxu0 %v207
      %575 = vmatprep.subr.mxu0 %v210
      %576 = vmatpush1.msra.mxu0 %v209
      %577 = vmatprep.subr.mxu0 %v212
      %578 = vmatpush1.msra.mxu0 %v211
      %579 = vmatprep.subr.mxu0 %v214
      %580 = vmatpush1.msra.mxu0 %v213
      %581 = vmatprep.subr.mxu0 %v216
      %582 = vmatpush1.msra.mxu0 %v215
      %583 = vmatprep.subr.mxu0 %v218
      %584 = vmatpush1.msra.mxu0 %v217
      %585 = vmatprep.subr.mxu0 %v220
      %586 = vmatpush1.msra.mxu0 %v219
      %587 = vmatprep.subr.mxu0 %v222
      %588 = vmatpush1.msra.mxu0 %v221
      %589 = vmatprep.subr.mxu0 %v224
      %590 = vmatpush1.msra.mxu0 %v223
      %591 = vmatprep.subr.mxu0 %v226
      %592 = vmatpush1.msra.mxu0 %v225
      %593 = vmatprep.subr.mxu0 %v228
      %594 = vmatpush1.msra.mxu0 %v227
      %595 = vmatprep.subr.mxu0 %v230
      %596 = vmatpush1.msra.mxu0 %v229
      %597 = vmatprep.subr.mxu0 %v232
      %598 = vmatpush1.msra.mxu0 %v231
      %599 = vmatprep.subr.mxu0 %v234
      %600 = vmatpush1.msra.mxu0 %v233
      %601 = vmatprep.subr.mxu0 %v236
      %602 = vmatpush1.msra.mxu0 %v235
      %603 = vmatprep.subr.mxu0 %v238
      %604 = vmatpush1.msra.mxu0 %v237
      %605 = vmatprep.subr.mxu0 %v240
      %606 = vmatpush1.msra.mxu0 %v239
      %607 = vmatprep.subr.mxu0 %v242
      %608 = vmatpush1.msra.mxu0 %v241
      %609 = vmatprep.subr.mxu0 %v244
      %610 = vmatpush1.msra.mxu0 %v243
      %611 = vmatprep.subr.mxu0 %v246
      %612 = vmatpush1.msra.mxu0 %v245
      %613 = vmatprep.subr.mxu0 %v248
      %614 = vmatpush1.msra.mxu0 %v247
      %615 = vmatprep.subr.mxu0 %v250
      %616 = vmatpush1.msra.mxu0 %v249
      %617 = vmatprep.subr.mxu0 %v252
      %618 = vmatpush1.msra.mxu0 %v251
      %619 = vmatprep.subr.mxu0 %v254
      %620 = vmatpush1.msra.mxu0 %v253
      %621 = vmatprep.subr.mxu0 %v256
      %622 = vmatpush1.msra.mxu0 %v255
      %623 = vmatprep.mubr.f32.mxu0 %v557
      %624 = vmatmul.mubr.f32.gmra.mrb[0].mxu0 %v555
      %v625 = vpop.f32.mrb[0].mxu0
      %v626 = vadd.f32 0.0, %v625
      %v627 = vpop.f32.mrb[0].mxu0
      %v628 = vadd.f32 0.0, %v627
      %629 = vdwg.mxu0
      %v630 = vmul.f32 %v327, 0.020408163
      %v631 = vmul.f32 %v329, 0.020408163
      %v632 = vmul.f32 %v401, 0.020408163
      %v633 = vmul.f32 %v403, 0.020408163
      %v634 = vmul.f32 %v632, %v327
      %v635 = vmul.f32 %v633, %v329
      %v636 = vsub.f32 %v626, %v634
      %v637 = vsub.f32 %v628, %v635
      %v638 = vmul.f32 %v630, %v401
      %v639 = vmul.f32 %v631, %v403
      %v640 = vsub.f32 %v636, %v638
      %v641 = vsub.f32 %v637, %v639
      %v642 = vmul.f32 %v630, %v632
      %v643 = vmul.f32 %v631, %v633
      %v644 = vmul.f32 %v642, 49.0
      %v645 = vmul.f32 %v643, 49.0
      %v646 = vadd.f32 %v640, %v644
      %v647 = vadd.f32 %v641, %v645
      %v648 = vmul.f32 %v630, 2.0
      %v649 = vmul.f32 %v631, 2.0
      %v650 = vmul.f32 %v648, %v327
      %v651 = vmul.f32 %v649, %v329
      %v652 = vsub.f32 %v476, %v650
      %v653 = vsub.f32 %v478, %v651
      %v654 = vmul.f32 %v630, %v630
      %v655 = vmul.f32 %v631, %v631
      %v656 = vmul.f32 %v654, 49.0
      %v657 = vmul.f32 %v655, 49.0
      %v658 = vadd.f32 %v652, %v656
      %v659 = vadd.f32 %v653, %v657
      %v660 = vmul.f32 %v632, 2.0
      %v661 = vmul.f32 %v633, 2.0
      %v662 = vmul.f32 %v660, %v401
      %v663 = vmul.f32 %v661, %v403
      %v664 = vsub.f32 %v551, %v662
      %v665 = vsub.f32 %v553, %v663
      %v666 = vmul.f32 %v632, %v632
      %v667 = vmul.f32 %v633, %v633
      %v668 = vmul.f32 %v666, 49.0
      %v669 = vmul.f32 %v667, 49.0
      %v670 = vadd.f32 %v664, %v668
      %v671 = vadd.f32 %v665, %v669
      %v672 = vmul.f32 %v646, %v646
      %v673 = vmul.f32 %v647, %v647
      %v674 = vmul.f32 %v658, %v670
      %v675 = vmul.f32 %v659, %v671
      %v676 = vadd.f32 %v674, 1e-05
      %v677 = vadd.f32 %v675, 1e-05
      %v678 = vrcp.pop %v676
      %v679 = vmul.f32 %v672, %v678
      %v680 = vrcp.pop %v677
      %v681 = vmul.f32 %v673, %v680
      %v682 = vand.u32 2147483647, %v646
      %v683 = vand.u32 2147483647, %v647
      %v684 = vadd.f32 %v682, 1e-05
      %v685 = vadd.f32 %v683, 1e-05
      %v686 = vrcp.pop %v684
      %v687 = vmul.f32 %v646, %v686
      %v688 = vrcp.pop %v685
      %v689 = vmul.f32 %v647, %v688
      %v690 = vmul.f32 %v679, %v687
      %v691 = vmul.f32 %v681, %v689
      %v694 = vcombine.low %v690, %v691
      %696 = vst [vmem:[%s190] sm:$0x77] %v694
      %p697 = scmp.lt.s32.totalorder %s14, 1
      %s698 = scalar_select %p697, %s14, 1
      %s699 = smul.addr %s698, 2
      %s700 = smul.addr %s699, 4
      %s701 = scalar_lea.vmem %s3, %s700
      // Predicated region
      $region33: #{ncc_loss.1} parent=31 // pred_check
        %p702 = pneg %p105
      $region34: #{ncc_loss.1} parent=31 // pred_check_branch
        %704 = sbr.rel (%p702) target = $region36
      $region35: #{ncc_loss.1} parent=31 // pred_region
        _
      $region36: #{ncc_loss.1} parent=31 // pred_fallthru
        _
    $region32: #{ncc_loss.1} parent=5 // pred_fallthru
      _
    %p705 = scmp.le.s32.totalorder 2, %s9
    // Predicated region
    $region37: #{ncc_loss.1} parent=5 // pred_check
      %p706 = pneg %p705
    $region38: #{ncc_loss.1} parent=5 // pred_check_branch
      %708 = sbr.rel (%p706) target = $region40
    $region39: #{ncc_loss.1} parent=5 // pred_region
      %s709 = ssub.s32 %s9, 2
      // Predicated region
      $region41: #{ncc_loss.1} parent=39 // pred_check
        %p710 = pneg %p111
      $region42: #{ncc_loss.1} parent=39 // pred_check_branch
        %712 = sbr.rel (%p710) target = $region44
      $region43: #{ncc_loss.1} parent=39 // pred_region
        %p713 = scmp.lt.s32.totalorder %s15, 1
        %s714 = scalar_select %p713, %s15, 1
        %s715 = smul.addr %s714, 2
        %s716 = smul.addr %s715, 4
        %s717 = scalar_lea.vmem %s3, %s716
      $region44: #{ncc_loss.1} parent=39 // pred_fallthru
        _
    $region40: #{ncc_loss.1} parent=5 // pred_fallthru
      _
  $region6: #{ncc_loss.1} parent=0 // loop_footer
    %s13 = sadd.s32 1, %s9
  $region7: #{ncc_loss.1} parent=0 // loop_footer_branch
    %8 = sbr.rel target = $region3
  $region8: #{ncc_loss.1} parent=0 // loop_exit
    _

</llo_original>
